<compile_context>
chip_gen: v7x
topology: tpu7x:2x2x1
jax: 0.10.0
libtpu: 0.0.40
codegen_flags: <defaults>
</compile_context>

<pallas_src>
import jax
import jax.numpy as jnp
from jax.experimental import pallas as pl
from jax.experimental.pallas import tpu as pltpu


def _add_embed_kernel(x_ref, w_ref, o_ref):
    # x_ref / o_ref: (TB, TC); w_ref: (1, TC) broadcast over the batch rows.
    o_ref[...] = x_ref[...] + w_ref[...]


def _pick_tiles(B, cols, itemsize, per_buffer_bytes=2 << 20):
    """Pick (batch_tile, column_tile) against a ~2 MiB per-buffer VMEM budget.

    With double-buffered x / out (+ a thin weight row) this stays well inside
    the scoped-VMEM defaults on v5e/v6e/v7x.  The column tile is a multiple of
    128 (or the full extent) so stores are unmasked full-lane vst; the batch
    tile is the full batch when it fits, else a sublane-aligned slice.
    """
    budget_elems = max(128, per_buffer_bytes // max(1, itemsize))
    if B * 128 <= budget_elems:
        tb = B
    else:
        sub = max(8, 32 // max(1, itemsize))          # 8 f32 / 16 bf16 / 32 int8
        tb = max(sub, (budget_elems // 128) // sub * sub)
    tc_budget = max(128, budget_elems // max(1, tb))
    if cols <= tc_budget:
        tc = cols
    else:
        tc = (tc_budget // 128) * 128
    return tb, tc


def token_embedding_forward(x, weight, transpose=None, *, per_buffer_bytes=2 << 20):
    """x: (B, L, H); weight: (L, H). Returns x + weight broadcast over batch."""
    if transpose is not None:
        # Mirror the reference module's behaviour exactly.
        raise ValueError('For now, transpose is not supported by TokenEmbedding.')

    B, L, H = x.shape
    assert weight.shape == (L, H), (weight.shape, (L, H))

    cols = L * H
    # One-time layout/dtype prep outside the hot loop.  The reshapes are on
    # contiguous arrays -> metadata only, no extra HBM pass (beyond an
    # unavoidable cast if dtypes differ).
    x2 = x.reshape(B, cols)
    w2 = weight.astype(x.dtype).reshape(1, cols)

    TB, TC = _pick_tiles(B, cols, jnp.dtype(x.dtype).itemsize, per_buffer_bytes)
    grid = (pl.cdiv(cols, TC), pl.cdiv(B, TB))  # columns outer, batch INNER

    out2 = pl.pallas_call(
        _add_embed_kernel,
        out_shape=jax.ShapeDtypeStruct((B, cols), x.dtype),
        grid_spec=pltpu.PrefetchScalarGridSpec(
            num_scalar_prefetch=0,
            grid=grid,
            in_specs=[
                pl.BlockSpec((TB, TC), lambda c, b: (b, c)),   # x tile
                # Constant along the inner (batch) grid axis -> Pallas skips
                # re-DMAing the weight tile while b varies.
                pl.BlockSpec((1, TC), lambda c, b: (0, c)),    # weight tile
            ],
            out_specs=pl.BlockSpec((TB, TC), lambda c, b: (b, c)),
        ),
        compiler_params=pltpu.CompilerParams(
            # Both grid axes are independent -> shardable across v7x's 2 TCs.
            dimension_semantics=("parallel", "parallel"),
        ),
    )(x2, w2)

    return out2.reshape(B, L, H)


def _reference(x, weight):
    return x + weight[None, :, :]


if __name__ == "__main__":
    key = jax.random.PRNGKey(0)

    # --- main small-shape check (matches the module's implied shapes) -------
    B, L, H = 2, 8, 32
    kx, kw = jax.random.split(key)
    x = jax.random.normal(kx, (B, L, H), dtype=jnp.float32)
    # nn.Embedding default init is N(0, 1); deterministic table here.
    weight = jax.random.normal(kw, (L, H), dtype=jnp.float32)

    out = jax.block_until_ready(token_embedding_forward(x, weight))
    ref = _reference(x, weight)
    assert out.shape == (B, L, H)
    assert jnp.allclose(out, ref, atol=1e-6), "mismatch vs reference"

    # --- multi-tile path (tiny artificial VMEM budget forces a real grid) ---
    B2, L2, H2 = 4, 17, 128
    kx2, kw2 = jax.random.split(jax.random.fold_in(key, 1))
    x_big = jax.random.normal(kx2, (B2, L2, H2), dtype=jnp.float32)
    w_big = jax.random.normal(kw2, (L2, H2), dtype=jnp.float32)
    out_big = jax.block_until_ready(
        token_embedding_forward(x_big, w_big, per_buffer_bytes=4096))
    assert jnp.allclose(out_big, _reference(x_big, w_big), atol=1e-6), \
        "tiled path mismatch vs reference"

    # --- the reference module raises on any non-None transpose; mirror it ---
    try:
        token_embedding_forward(x, weight, transpose=True)
        raise AssertionError("expected ValueError for transpose != None")
    except ValueError:
        pass

    print("KERNEL_OK")
</pallas_src>

<mosaic_0001>
module attributes {stable_mosaic.version = 11 : i64} {
  func.func @_add_embed_kernel(%arg0: i32, %arg1: i32, %arg2: memref<2x256xf32, #tpu.memory_space<vmem>>, %arg3: memref<1x256xf32, #tpu.memory_space<vmem>>, %arg4: memref<2x256xf32, #tpu.memory_space<vmem>>) attributes {dimension_semantics = [#tpu.dimension_semantics<parallel>, #tpu.dimension_semantics<parallel>], iteration_bounds = array<i64: 1, 1>, scalar_prefetch = 0 : i64, scratch_operands = 0 : i64, tpu.core_type = #tpu.core_type<tc>, window_params = [{transform_indices = @transform_0, window_bounds = array<i64: 2, 256>}, {transform_indices = @transform_1, window_bounds = array<i64: 1, 256>}, {transform_indices = @transform_2, window_bounds = array<i64: 2, 256>}]} {
    %c0 = arith.constant 0 : index
    %c0_0 = arith.constant 0 : index
    %0 = vector.load %arg2[%c0, %c0_0] : memref<2x256xf32, #tpu.memory_space<vmem>>, vector<2x256xf32>
    %c0_1 = arith.constant 0 : index
    %c0_2 = arith.constant 0 : index
    %1 = vector.load %arg3[%c0_1, %c0_2] : memref<1x256xf32, #tpu.memory_space<vmem>>, vector<1x256xf32>
    %2 = vector.broadcast %1 : vector<1x256xf32> to vector<2x256xf32>
    %3 = arith.addf %0, %2 : vector<2x256xf32>
    %c0_3 = arith.constant 0 : index
    %c0_4 = arith.constant 0 : index
    %4 = vector.load %arg4[%c0_3, %c0_4] : memref<2x256xf32, #tpu.memory_space<vmem>>, vector<2x256xf32>
    tpu.vector_store %arg4[%c0_3, %c0_4], %3 {strides = array<i32>} : memref<2x256xf32, #tpu.memory_space<vmem>>, vector<2x256xf32>,
    return
  }
  func.func @transform_0(%arg0: i32, %arg1: i32) -> (i32, i32) {
    %c0_i32 = arith.constant 0 : i32
    return %arg1, %arg0 : i32, i32
  }
  func.func @transform_1(%arg0: i32, %arg1: i32) -> (i32, i32) {
    %c0_i32 = arith.constant 0 : i32
    %c0_i32_0 = arith.constant 0 : i32
    return %c0_i32, %arg0 : i32, i32
  }
  func.func @transform_2(%arg0: i32, %arg1: i32) -> (i32, i32) {
    %c0_i32 = arith.constant 0 : i32
    return %arg1, %arg0 : i32, i32
  }
}

</mosaic_0001>

<llo_original>
// kernel: tpu_custom_call.1
$region0: #{tpu_custom_call.1}
  #allocation0 [shape = 'u32[]', space=smem, size = 0x4, offset = 0x4, fixed_abs, tag = 'smem constant byte address 0x4 - core index']
  #allocation1 [shape = 'u32[144,128]{1,0:T(1,128)}', space=vmem, size = 0x12000, scoped, tag = 'internal scratch']
  %s0 = inlined_call_operand.hbm [shape: f32[2,256], index: 0, kind: input, shape index: {}]
  %s1 = inlined_call_operand.vmem [shape: f32[1,256], index: 1, kind: input, shape index: {}]
  %s2 = inlined_call_operand.hbm [shape: f32[2,256], index: 2, kind: output, shape index: {}]
  %s3 = sld [smem:[#allocation0]]
  $region22: #{tpu_custom_call.1} parent=0
    _
  %s5 = ssub.s32 1, %s3
  %s6 = scalar_select 0, %s5, %s3
  $region1: #{tpu_custom_call.1} parent=0
    #allocation2 [shape = 'u8[2048]{0}', space=vmem, size = 0x800, scoped, tag = 'input window, operand 0, single buffered']
    #allocation3 [shape = 's32[1]{0}', space=sflag, size = 0x4, scoped, tag = 'scoped memory for tpu_custom_call.1']
    #allocation4 [shape = 's32[1]{0}', space=sflag, size = 0x4, scoped, tag = 'scoped memory for tpu_custom_call.1']
    #allocation5 [shape = 'u8[2048]{0}', space=vmem, size = 0x800, scoped, tag = 'output window, operand 0, single buffered']
    %7 = vsyncpa [#allocation3], 0
    %8 = vsyncpa [#allocation4], 0
    // Predicated region
    $region2: #{tpu_custom_call.1} parent=1 // pred_check
      _
    $region3: #{tpu_custom_call.1} parent=1 // pred_check_branch
      %10 = sbr.rel (0) target = $region5
    $region4: #{tpu_custom_call.1} parent=1 // pred_region
      %s12 = ssub.s32 64, 64
      %13 = vsyncadd [#allocation3], %s12
      %s15 = sshll.u32 [#allocation2], 4
      %s16 = int_to_ptr.vmem [resolvable:$true] %s15
      %18 = dma.hbm_to_vmem [thread:$0]  %s0, 64, %s16, [#allocation3]
    $region5: #{tpu_custom_call.1} parent=1 // pred_fallthru
      _
    // Predicated region
    $region6: #{tpu_custom_call.1} parent=1 // pred_check
      _
    $region7: #{tpu_custom_call.1} parent=1 // pred_check_branch
      %20 = sbr.rel (0) target = $region9
    $region8: #{tpu_custom_call.1} parent=1 // pred_region
      _
    $region9: #{tpu_custom_call.1} parent=1 // pred_fallthru
      _
    // Predicated region
    $region10: #{tpu_custom_call.1} parent=1 // pred_check
      _
    $region11: #{tpu_custom_call.1} parent=1 // pred_check_branch
      %22 = sbr.rel (0) target = $region13
    $region12: #{tpu_custom_call.1} parent=1 // pred_region
      %23 = dma.done [#allocation3], 64
    $region13: #{tpu_custom_call.1} parent=1 // pred_fallthru
      _
    %v24 = vld [vmem:[#allocation2] sm:$0xf]
    %v25 = vld [vmem:[%s1] sm:$0x3]
    %v27 = vlaneseq
    %v28 = vshrl.u32 %v27, 7
    %v29 = vsub.s32 0, %v28
    %v30 = vrot.slane %v25, %v29
    %v31 = vlaneseq
    %v32 = vshrl.u32 %v31, 7
    %v33 = vsub.s32 1, %v32
    %v34 = vrot.slane %v25, %v33
    %v35 = vcombine.low %v30, %v34
    %v37 = vunpack.c.l.s4 1983009808
    %v38 = vunpack.c.0.s8 %v37
    %v39 = vlaneseq
    %v40 = vshrl.u32 %v39, 7
    %v41 = vsub.s32 %v38, %v40
    %v42 = vrot.slane %v35, %v41
    %v44 = vadd.f32 %v24, %v42
    %45 = vst [vmem:[#allocation5] sm:$0xf] %v44
    // Predicated region
    $region14: #{tpu_custom_call.1} parent=1 // pred_check
      _
    $region15: #{tpu_custom_call.1} parent=1 // pred_check_branch
      %47 = sbr.rel (0) target = $region17
    $region16: #{tpu_custom_call.1} parent=1 // pred_region
      %s49 = ssub.s32 64, 64
      %50 = vsyncadd [#allocation4], %s49
      %s52 = sshll.u32 [#allocation5], 4
      %s53 = int_to_ptr.vmem [resolvable:$true] %s52
      %55 = dma.vmem_to_hbm [thread:$0]  %s53, 64, %s2, [#allocation4]
    $region17: #{tpu_custom_call.1} parent=1 // pred_fallthru
      _
    // Predicated region
    $region18: #{tpu_custom_call.1} parent=1 // pred_check
      _
    $region19: #{tpu_custom_call.1} parent=1 // pred_check_branch
      %57 = sbr.rel (0) target = $region21
    $region20: #{tpu_custom_call.1} parent=1 // pred_region
      %58 = dma.done [#allocation4], 64
    $region21: #{tpu_custom_call.1} parent=1 // pred_fallthru
      _
    %59 = vsyncpa [#allocation3], 1
    %60 = vsyncpa [#allocation4], 1

</llo_original>
